<compile_context>
chip_gen: v7x
topology: tpu7x:2x2x1
jax: 0.10.0
libtpu: 0.0.40
codegen_flags: <defaults>
</compile_context>

<pallas_src>
import functools

import jax
import jax.numpy as jnp
from jax.experimental import pallas as pl
from jax.experimental.pallas import tpu as pltpu


_SQRT_2_OVER_PI = 0.7978845608028654  # sqrt(2/pi), matches torch GELU 'tanh'


def _gelu_tanh(x):
    # 0.5*x*(1 + tanh(sqrt(2/pi)*(x + 0.044715*x^3))), with the cubic factored
    # as x*(1 + 0.044715*x*x) to save one VALU multiply per element.
    inner = _SQRT_2_OVER_PI * x * (1.0 + 0.044715 * x * x)
    return 0.5 * x * (1.0 + jnp.tanh(inner))


def _chunked_fc_gelu_proj(x, w1_ref, b1_ref, w2_ref, acc, hsub, n_sub):
    """acc + sum_k gelu(x @ w1[:, k] + b1[k]) @ w2[k, :] with f32 accumulation.

    The hidden dim seen by this body is split into `n_sub` independent
    sub-chunks of width `hsub` (static slices -> free ref views) so the LLO
    scheduler can overlap GELU (VPU/EUP slots) of chunk k with the MXU pushes
    of chunk k+1, and the peak f32 intermediate is (tm, hsub) rather than (tm, H).
    """
    for k in range(n_sub):
        lo, hi = k * hsub, (k + 1) * hsub
        h = jnp.dot(x, w1_ref[:, lo:hi], preferred_element_type=jnp.float32)
        h = h + b1_ref[:, lo:hi].astype(jnp.float32)
        h = _gelu_tanh(h)
        h = h.astype(w2_ref.dtype)
        acc = acc + jnp.dot(h, w2_ref[lo:hi, :],
                            preferred_element_type=jnp.float32)
    return acc


def _mlp_fused_kernel(x_ref, w1_ref, b1_ref, w2_ref, b2_ref, o_ref, *,
                      hsub, n_sub):
    # Weights fully resident; single (parallel) row-tile grid axis; no scratch.
    x = x_ref[...]  # keep operand dtype (bf16 stays bf16 -> native MXU path)
    acc = b2_ref[...].astype(jnp.float32)          # (1, C), broadcasts below
    acc = _chunked_fc_gelu_proj(x, w1_ref, b1_ref, w2_ref, acc, hsub, n_sub)
    o_ref[...] = acc.astype(o_ref.dtype)


def _mlp_stream_kernel(x_ref, w1_ref, b1_ref, w2_ref, b2_ref, o_ref, acc_ref, *,
                       hsub, n_sub):
    # Grid: (row tiles, H chunks); innermost "arbitrary" axis reduces over the
    # hidden dim into the f32 accumulator, initialized with b2 so the finalize
    # is a pure cast.
    h_idx = pl.program_id(1)

    @pl.when(h_idx == 0)
    def _init():
        acc_ref[...] = jnp.broadcast_to(
            b2_ref[...].astype(jnp.float32), acc_ref.shape)

    x = x_ref[...]
    acc_ref[...] = _chunked_fc_gelu_proj(
        x, w1_ref, b1_ref, w2_ref, acc_ref[...], hsub, n_sub)

    @pl.when(h_idx == pl.num_programs(1) - 1)
    def _finalize():
        o_ref[...] = acc_ref[...].astype(o_ref.dtype)


def _round_up(n, m):
    return (n + m - 1) // m * m


def _sublane(dtype):
    bits = jnp.dtype(dtype).itemsize * 8
    return {32: 8, 16: 16, 8: 32}.get(bits, 8)


def _vmem_budget_bytes():
    # Derive from the actual chip (v5e/v6e: 128 MiB, v7x: 64 MiB per TC),
    # keeping ~25% headroom for Mosaic internal scratch.
    try:
        cap = int(pltpu.get_tpu_info().vmem_capacity_bytes)
    except Exception:
        cap = 64 * 1024 * 1024  # conservative (v7x per-TC size)
    return int(cap * 3 // 4)


def _pick_hsub(chunk):
    # Largest lane-aligned sub-chunk <= 512 that divides `chunk`.
    for c in (512, 256, 128):
        if chunk >= c and chunk % c == 0:
            return c
    return chunk


def mlp_forward(x, w1, b1, w2, b2, *, tm=256, th=None, compute_dtype=None,
                vmem_limit_bytes=None, interpret=False):
    """GPT-2 MLP: gelu_tanh(x @ w1 + b1) @ w2 + b2.

    x:  (B, T, C)
    w1: (C, H), b1: (H,)   -- c_fc weights stored (in, out) (transposed vs torch)
    w2: (H, C), b2: (C,)   -- c_proj
    tm: row tile over the flattened (B*T) dim (padded / capped as needed).
    th: hidden-dim chunk for weight streaming; None => resident weights when
        they fit the VMEM budget, otherwise auto-stream.
    compute_dtype: optional (e.g. jnp.bfloat16) operand dtype for the matmuls;
        accumulation stays f32 and the output keeps x.dtype.
    """
    B, T, C = x.shape
    H = w1.shape[1]
    assert w1.shape == (C, H) and w2.shape == (H, C)
    assert b1.shape == (H,) and b2.shape == (C,)

    out_dtype = x.dtype
    if compute_dtype is not None:
        x = x.astype(compute_dtype)
        w1 = w1.astype(compute_dtype)
        w2 = w2.astype(compute_dtype)

    in_bytes = jnp.dtype(x.dtype).itemsize
    out_bytes = jnp.dtype(out_dtype).itemsize
    w_bytes = jnp.dtype(w1.dtype).itemsize
    budget = _vmem_budget_bytes() if vmem_limit_bytes is None else int(vmem_limit_bytes)

    M = B * T
    su = max(_sublane(x.dtype), _sublane(out_dtype))
    M_su = _round_up(M, su)

    # --- decide resident vs. hidden-dim streaming ------------------------------
    def _resident_footprint(tm_v):
        weights = (2 * C * H + H + C) * w_bytes             # single-buffered
        tiles = 2 * tm_v * C * (in_bytes + out_bytes)       # x/out double buffers
        inter = tm_v * _pick_hsub(H) * 4 + tm_v * C * 4     # gelu chunk + f32 acc
        return weights + tiles + inter

    th_eff = th
    if th_eff is None and _resident_footprint(min(tm, M_su)) > budget:
        for cand in (2048, 1024, 512, 256, 128):
            if H > cand and H % cand == 0:
                th_eff = cand
                break
        # Streaming re-reads the weights once per row tile -> amortize with a
        # bigger tm.
        if th_eff is not None:
            tm = max(tm, 512)
    if th_eff is None:
        th_eff = H
    assert H % th_eff == 0, "hidden dim must be divisible by the H chunk"
    assert th_eff == H or th_eff % 128 == 0, "H chunk must be lane-aligned"

    # --- row tiling -------------------------------------------------------------
    tm_eff = min(tm, M_su)
    # Keep >=2 row tiles when M allows so v7x's two TensorCores both get work.
    if M_su // tm_eff < 2 and M_su >= 2 * su:
        tm_eff = _round_up((M_su + 1) // 2, su)
    M_pad = _round_up(M, tm_eff)
    n_rows = M_pad // tm_eff

    hsub = _pick_hsub(th_eff)
    n_sub = th_eff // hsub

    x2d = x.reshape(M, C)
    if M_pad != M:
        x2d = jnp.pad(x2d, ((0, M_pad - M), (0, 0)))
    b1_2d = b1.reshape(1, H)
    b2_2d = b2.reshape(1, C)

    weight_reads = 1 if th_eff == H else n_rows
    cost = pl.CostEstimate(
        flops=4 * M_pad * C * H,
        transcendentals=M_pad * H,
        bytes_accessed=(M_pad * C * in_bytes + M_pad * C * out_bytes
                        + weight_reads * (2 * C * H + H + C) * w_bytes),
    )

    if th_eff == H:
        # Fully fused, weights resident.  Constant-index weights/biases are
        # single-buffered (one DMA for the whole kernel, half the VMEM).
        kernel = functools.partial(_mlp_fused_kernel, hsub=hsub, n_sub=n_sub)
        grid_spec = pltpu.PrefetchScalarGridSpec(
            num_scalar_prefetch=0,
            grid=(n_rows,),
            in_specs=[
                pl.BlockSpec((tm_eff, C), lambda i: (i, 0)),
                pl.BlockSpec((C, H), lambda i: (0, 0),
                             pipeline_mode=pl.Buffered(1)),
                pl.BlockSpec((1, H), lambda i: (0, 0),
                             pipeline_mode=pl.Buffered(1)),
                pl.BlockSpec((H, C), lambda i: (0, 0),
                             pipeline_mode=pl.Buffered(1)),
                pl.BlockSpec((1, C), lambda i: (0, 0),
                             pipeline_mode=pl.Buffered(1)),
            ],
            out_specs=pl.BlockSpec((tm_eff, C), lambda i: (i, 0)),
            scratch_shapes=[],
        )
        dim_sem = ("parallel",)
    else:
        # Hidden-dim streaming: innermost reduction axis over H chunks,
        # accumulated in an f32 VMEM scratch initialized with b2.
        kernel = functools.partial(_mlp_stream_kernel, hsub=hsub, n_sub=n_sub)
        grid_spec = pltpu.PrefetchScalarGridSpec(
            num_scalar_prefetch=0,
            grid=(n_rows, H // th_eff),
            in_specs=[
                pl.BlockSpec((tm_eff, C), lambda i, h: (i, 0)),   # x row tile
                pl.BlockSpec((C, th_eff), lambda i, h: (0, h)),   # w1 chunk
                pl.BlockSpec((1, th_eff), lambda i, h: (0, h)),   # b1 chunk
                pl.BlockSpec((th_eff, C), lambda i, h: (h, 0)),   # w2 chunk
                pl.BlockSpec((1, C), lambda i, h: (0, 0),
                             pipeline_mode=pl.Buffered(1)),       # b2 (constant)
            ],
            out_specs=pl.BlockSpec((tm_eff, C), lambda i, h: (i, 0)),
            scratch_shapes=[pltpu.VMEM((tm_eff, C), jnp.float32)],
        )
        dim_sem = ("parallel", "arbitrary")

    out2d = pl.pallas_call(
        kernel,
        out_shape=jax.ShapeDtypeStruct((M_pad, C), out_dtype),
        grid_spec=grid_spec,
        compiler_params=pltpu.CompilerParams(
            dimension_semantics=dim_sem,
            vmem_limit_bytes=budget,
        ),
        cost_estimate=cost,
        interpret=interpret,
    )(x2d, w1, b1_2d, w2, b2_2d)

    if M_pad != M:
        out2d = out2d[:M]
    return out2d.reshape(B, T, C)


if __name__ == "__main__":
    # Small GPT-2-style config with lane-aligned channels:
    # n_embd=128, hidden=4*128=512, batch=2, seq=8.
    B, T, C = 2, 8, 128
    H = 4 * C

    key = jax.random.PRNGKey(0)
    kx, k1, k2, k3, k4 = jax.random.split(key, 5)

    x = jax.random.normal(kx, (B, T, C), dtype=jnp.float32)
    w1 = jax.random.normal(k1, (C, H), dtype=jnp.float32) * (1.0 / jnp.sqrt(C))
    b1 = jax.random.normal(k2, (H,), dtype=jnp.float32) * 0.02
    w2 = jax.random.normal(k3, (H, C), dtype=jnp.float32) * (1.0 / jnp.sqrt(H))
    b2 = jax.random.normal(k4, (C,), dtype=jnp.float32) * 0.02

    # Pure-JAX reference.
    def ref(xv):
        h = xv @ w1 + b1
        h = 0.5 * h * (1.0 + jnp.tanh(_SQRT_2_OVER_PI * (h + 0.044715 * h ** 3)))
        return h @ w2 + b2

    expected = ref(x)

    # Fused, weights-resident path (no accumulator scratch).
    out = mlp_forward(x, w1, b1, w2, b2)
    jax.block_until_ready(out)
    assert out.shape == (B, T, C)
    err = float(jnp.max(jnp.abs(out - expected)))
    assert jnp.allclose(out, expected, atol=2e-2, rtol=2e-2), f"fused max err {err}"

    # Hidden-dim streaming (accumulator) path.
    out_stream = mlp_forward(x, w1, b1, w2, b2, tm=8, th=256)
    jax.block_until_ready(out_stream)
    err = float(jnp.max(jnp.abs(out_stream - expected)))
    assert jnp.allclose(out_stream, expected, atol=2e-2, rtol=2e-2), f"stream max err {err}"

    # bf16 operand path (native MXU dtype, f32 accumulation) — looser tolerance.
    out_bf16 = mlp_forward(x, w1, b1, w2, b2, compute_dtype=jnp.bfloat16)
    jax.block_until_ready(out_bf16)
    err = float(jnp.max(jnp.abs(out_bf16 - expected)))
    assert jnp.allclose(out_bf16, expected, atol=1e-1, rtol=1e-1), f"bf16 max err {err}"

    print("KERNEL_OK")
</pallas_src>

<mosaic_0001>
module attributes {stable_mosaic.version = 11 : i64} {
  func.func @_mlp_fused_kernel(%arg0: i32, %arg1: memref<8x128xf32, #tpu.memory_space<vmem>>, %arg2: memref<128x512xf32, #tpu.memory_space<vmem>>, %arg3: memref<1x512xf32, #tpu.memory_space<vmem>>, %arg4: memref<512x128xf32, #tpu.memory_space<vmem>>, %arg5: memref<1x128xf32, #tpu.memory_space<vmem>>, %arg6: memref<8x128xf32, #tpu.memory_space<vmem>>) attributes {dimension_semantics = [#tpu.dimension_semantics<parallel>], iteration_bounds = array<i64: 2>, scalar_prefetch = 0 : i64, scratch_operands = 0 : i64, tpu.core_type = #tpu.core_type<tc>, window_params = [{transform_indices = @transform_0, window_bounds = array<i64: 8, 128>}, {pipeline_mode = #tpu.pipeline_mode<synchronous>, transform_indices = @transform_1, window_bounds = array<i64: 128, 512>}, {pipeline_mode = #tpu.pipeline_mode<synchronous>, transform_indices = @transform_2, window_bounds = array<i64: 1, 512>}, {pipeline_mode = #tpu.pipeline_mode<synchronous>, transform_indices = @transform_3, window_bounds = array<i64: 512, 128>}, {pipeline_mode = #tpu.pipeline_mode<synchronous>, transform_indices = @transform_4, window_bounds = array<i64: 1, 128>}, {transform_indices = @transform_5, window_bounds = array<i64: 8, 128>}]} {
    %c0 = arith.constant 0 : index
    %c0_0 = arith.constant 0 : index
    %0 = vector.load %arg1[%c0, %c0_0] : memref<8x128xf32, #tpu.memory_space<vmem>>, vector<8x128xf32>
    %c0_1 = arith.constant 0 : index
    %c0_2 = arith.constant 0 : index
    %1 = vector.load %arg5[%c0_1, %c0_2] : memref<1x128xf32, #tpu.memory_space<vmem>>, vector<1x128xf32>
    %c0_3 = arith.constant 0 : index
    %c0_4 = arith.constant 0 : index
    %2 = vector.load %arg2[%c0_3, %c0_4] : memref<128x512xf32, #tpu.memory_space<vmem>>, vector<128x512xf32>
    %cst = arith.constant dense<0.000000e+00> : vector<8x512xf32>
    %3 = tpu.matmul %0, %2, %cst {dimension_numbers = #tpu.dot_dimension_numbers<[1], [0], [0], [1], [0, 0, 1, 1], [], []>} : vector<8x128xf32>, vector<128x512xf32>, vector<8x512xf32> -> vector<8x512xf32>
    %c0_5 = arith.constant 0 : index
    %c0_6 = arith.constant 0 : index
    %4 = vector.load %arg3[%c0_5, %c0_6] : memref<1x512xf32, #tpu.memory_space<vmem>>, vector<1x512xf32>
    %5 = vector.broadcast %4 : vector<1x512xf32> to vector<8x512xf32>
    %6 = arith.addf %3, %5 : vector<8x512xf32>
    %cst_7 = arith.constant 0.797884583 : f32
    %7 = vector.broadcast %cst_7 : f32 to vector<8x512xf32>
    %8 = arith.mulf %7, %6 : vector<8x512xf32>
    %cst_8 = arith.constant 4.471500e-02 : f32
    %9 = vector.broadcast %cst_8 : f32 to vector<8x512xf32>
    %10 = arith.mulf %9, %6 : vector<8x512xf32>
    %11 = arith.mulf %10, %6 : vector<8x512xf32>
    %cst_9 = arith.constant 1.000000e+00 : f32
    %12 = vector.broadcast %cst_9 : f32 to vector<8x512xf32>
    %13 = arith.addf %12, %11 : vector<8x512xf32>
    %14 = arith.mulf %8, %13 : vector<8x512xf32>
    %cst_10 = arith.constant 5.000000e-01 : f32
    %15 = vector.broadcast %cst_10 : f32 to vector<8x512xf32>
    %16 = arith.mulf %15, %6 : vector<8x512xf32>
    %17 = math.tanh %14 : vector<8x512xf32>
    %cst_11 = arith.constant 1.000000e+00 : f32
    %18 = vector.broadcast %cst_11 : f32 to vector<8x512xf32>
    %19 = arith.addf %18, %17 : vector<8x512xf32>
    %20 = arith.mulf %16, %19 : vector<8x512xf32>
    %c0_12 = arith.constant 0 : index
    %c0_13 = arith.constant 0 : index
    %21 = vector.load %arg4[%c0_12, %c0_13] : memref<512x128xf32, #tpu.memory_space<vmem>>, vector<512x128xf32>
    %cst_14 = arith.constant dense<0.000000e+00> : vector<8x128xf32>
    %22 = tpu.matmul %20, %21, %cst_14 {dimension_numbers = #tpu.dot_dimension_numbers<[1], [0], [0], [1], [0, 0, 1, 1], [], []>} : vector<8x512xf32>, vector<512x128xf32>, vector<8x128xf32> -> vector<8x128xf32>
    %23 = vector.broadcast %1 : vector<1x128xf32> to vector<8x128xf32>
    %24 = arith.addf %23, %22 : vector<8x128xf32>
    %c0_15 = arith.constant 0 : index
    %c0_16 = arith.constant 0 : index
    %25 = vector.load %arg6[%c0_15, %c0_16] : memref<8x128xf32, #tpu.memory_space<vmem>>, vector<8x128xf32>
    tpu.vector_store %arg6[%c0_15, %c0_16], %24 {strides = array<i32>} : memref<8x128xf32, #tpu.memory_space<vmem>>, vector<8x128xf32>,
    return
  }
  func.func @transform_0(%arg0: i32) -> (i32, i32) {
    %c0_i32 = arith.constant 0 : i32
    %c0_i32_0 = arith.constant 0 : i32
    return %arg0, %c0_i32 : i32, i32
  }
  func.func @transform_1(%arg0: i32) -> (i32, i32) {
    %c0_i32 = arith.constant 0 : i32
    %c0_i32_0 = arith.constant 0 : i32
    %c0_i32_1 = arith.constant 0 : i32
    return %c0_i32, %c0_i32_0 : i32, i32
  }
  func.func @transform_2(%arg0: i32) -> (i32, i32) {
    %c0_i32 = arith.constant 0 : i32
    %c0_i32_0 = arith.constant 0 : i32
    %c0_i32_1 = arith.constant 0 : i32
    return %c0_i32, %c0_i32_0 : i32, i32
  }
  func.func @transform_3(%arg0: i32) -> (i32, i32) {
    %c0_i32 = arith.constant 0 : i32
    %c0_i32_0 = arith.constant 0 : i32
    %c0_i32_1 = arith.constant 0 : i32
    return %c0_i32, %c0_i32_0 : i32, i32
  }
  func.func @transform_4(%arg0: i32) -> (i32, i32) {
    %c0_i32 = arith.constant 0 : i32
    %c0_i32_0 = arith.constant 0 : i32
    %c0_i32_1 = arith.constant 0 : i32
    return %c0_i32, %c0_i32_0 : i32, i32
  }
  func.func @transform_5(%arg0: i32) -> (i32, i32) {
    %c0_i32 = arith.constant 0 : i32
    %c0_i32_0 = arith.constant 0 : i32
    return %arg0, %c0_i32 : i32, i32
  }
}

</mosaic_0001>

<llo_original>
// kernel: tpu_custom_call.1
$region0: #{tpu_custom_call.1}
  #allocation0 [shape = 'u32[]', space=smem, size = 0x4, offset = 0x4, fixed_abs, tag = 'smem constant byte address 0x4 - core index']
  #allocation1 [shape = 'u32[144,128]{1,0:T(1,128)}', space=vmem, size = 0x12000, scoped, tag = 'internal scratch']
  %s0 = inlined_call_operand.hbm [shape: f32[16,128], index: 0, kind: input, shape index: {}]
  %s1 = inlined_call_operand.hbm [shape: f32[128,512], index: 1, kind: input, shape index: {}]
  %s2 = inlined_call_operand.vmem [shape: f32[1,512], index: 2, kind: input, shape index: {}]
  %s3 = inlined_call_operand.hbm [shape: f32[512,128], index: 3, kind: input, shape index: {}]
  %s4 = inlined_call_operand.vmem [shape: f32[1,128], index: 4, kind: input, shape index: {}]
  %s5 = inlined_call_operand.hbm [shape: f32[16,128], index: 5, kind: output, shape index: {}]
  %s6 = sld [smem:[#allocation0]]
  $region65: #{tpu_custom_call.1} parent=0
    _
  %s8 = ssub.s32 1, %s6
  %s9 = scalar_select 0, %s8, %s6
  $region1: #{tpu_custom_call.1} parent=0
    #allocation2 [shape = 'u8[8192]{0}', space=vmem, size = 0x2000, scoped, tag = 'input window, operand 0']
    #allocation3 [shape = 's32[2]{0}', space=sflag, size = 0x8, scoped, tag = 'scoped memory for tpu_custom_call.1']
    #allocation4 [shape = 's32[2]{0}', space=sflag, size = 0x8, scoped, tag = 'scoped memory for tpu_custom_call.1']
    #allocation5 [shape = 'u8[262144]{0}', space=vmem, size = 0x40000, scoped, tag = 'input window, operand 1, single buffered']
    #allocation6 [shape = 's32[1]{0}', space=sflag, size = 0x4, scoped, tag = 'scoped memory for tpu_custom_call.1']
    #allocation7 [shape = 'u8[262144]{0}', space=vmem, size = 0x40000, scoped, tag = 'input window, operand 3, single buffered']
    #allocation8 [shape = 'u8[8192]{0}', space=vmem, size = 0x2000, scoped, tag = 'output window, operand 0']
    %10 = vsyncpa [#allocation3], 0
    %s11 = scalar_lea.sflag [#allocation3], 1
    %12 = vsyncpa %s11, 0
    %13 = vsyncpa [#allocation6], 0
    %14 = vsyncpa [#allocation4], 0
    %s15 = scalar_lea.sflag [#allocation4], 1
    %16 = vsyncpa %s15, 0
    loop: start=0, step=1, limit=4
    $region2: #{tpu_custom_call.1} parent=1 // loop_pre_header
      _
    $region3: #{tpu_custom_call.1} parent=1 // loop_header
      %s18 = sphi 0, %s22
      %p19 = scmp.ge.s32.totalorder %s18, 4
      %s28 = sphi 0, %s30
      %s31 = sphi 0, %s28
      %s32 = sphi 0, %s31
      %s48 = sphi 0, %s32
      %s52 = sphi 0, %s52
      %s54 = sphi 0, %s52
      %s55 = sphi 0, %s54
      %s69 = sphi 0, %s55
      %s73 = sphi 0, %s73
      %s75 = sphi 0, %s73
      %s76 = sphi 0, %s75
      %s90 = sphi 0, %s76
      %s94 = sphi 0, %s94
      %s96 = sphi 0, %s94
      %s97 = sphi 0, %s96
      %s111 = sphi 0, %s97
      %s115 = sphi 0, %s115
      %s117 = sphi 0, %s115
      %s118 = sphi 0, %s117
      %s132 = sphi 0, %s118
      %s138 = sphi 0, %s140
      %s141 = sphi 0, %s138
      %s142 = sphi 0, %s141
      %s158 = sphi 0, %s142
    $region4: #{tpu_custom_call.1} parent=1 // loop_header_branch
      %21 = sbr.rel (%p19) target = $region8
    $region5: #{tpu_custom_call.1} parent=1 // loop_body
      %s23 = ssub.s32 %s18, 1
      %s24 = ssub.s32 %s18, 2
      %s25 = sadd.s32 %s18, 1
      %s26 = ssub.s32 %s18, %s25
      %p27 = scmp.eq.s32.totalorder %s26, 0
      %s29 = sadd.s32 %s28, 1
      %s30 = scalar_select %p27, %s28, %s29
      %p33 = pneg %p27
      %p34 = scmp.eq.s32.totalorder %s18, 1
      %p35 = por %p33, %p34
      %p36 = scmp.ne.s32.totalorder %s28, %s31
      %p37 = scmp.eq.s32.totalorder %s18, 0
      %p38 = por %p36, %p37
      %p39 = scmp.ne.s32.totalorder %s28, %s31
      %p40 = scmp.eq.s32.totalorder %s23, 1
      %p41 = por %p39, %p40
      %p42 = scmp.ne.s32.totalorder %s31, %s32
      %p43 = scmp.eq.s32.totalorder %s23, 0
      %p44 = por %p42, %p43
      %p45 = scmp.ne.s32.totalorder %s31, %s32
      %p46 = scmp.eq.s32.totalorder %s24, 1
      %p47 = por %p45, %p46
      %p49 = scmp.ne.s32.totalorder %s32, %s48
      %p50 = scmp.eq.s32.totalorder %s24, 0
      %p51 = por %p49, %p50
      %s53 = sadd.s32 %s52, 1
      %p56 = scmp.eq.s32.totalorder %s18, 1
      %p57 = scmp.ne.s32.totalorder %s52, %s54
      %p58 = scmp.eq.s32.totalorder %s18, 0
      %p59 = por %p57, %p58
      %p60 = scmp.ne.s32.totalorder %s52, %s54
      %p61 = scmp.eq.s32.totalorder %s23, 1
      %p62 = por %p60, %p61
      %p63 = scmp.ne.s32.totalorder %s54, %s55
      %p64 = scmp.eq.s32.totalorder %s23, 0
      %p65 = por %p63, %p64
      %p66 = scmp.ne.s32.totalorder %s54, %s55
      %p67 = scmp.eq.s32.totalorder %s24, 1
      %p68 = por %p66, %p67
      %p70 = scmp.ne.s32.totalorder %s55, %s69
      %p71 = scmp.eq.s32.totalorder %s24, 0
      %p72 = por %p70, %p71
      %s74 = sadd.s32 %s73, 1
      %p77 = scmp.eq.s32.totalorder %s18, 1
      %p78 = scmp.ne.s32.totalorder %s73, %s75
      %p79 = scmp.eq.s32.totalorder %s18, 0
      %p80 = por %p78, %p79
      %p81 = scmp.ne.s32.totalorder %s73, %s75
      %p82 = scmp.eq.s32.totalorder %s23, 1
      %p83 = por %p81, %p82
      %p84 = scmp.ne.s32.totalorder %s75, %s76
      %p85 = scmp.eq.s32.totalorder %s23, 0
      %p86 = por %p84, %p85
      %p87 = scmp.ne.s32.totalorder %s75, %s76
      %p88 = scmp.eq.s32.totalorder %s24, 1
      %p89 = por %p87, %p88
      %p91 = scmp.ne.s32.totalorder %s76, %s90
      %p92 = scmp.eq.s32.totalorder %s24, 0
      %p93 = por %p91, %p92
      %s95 = sadd.s32 %s94, 1
      %p98 = scmp.eq.s32.totalorder %s18, 1
      %p99 = scmp.ne.s32.totalorder %s94, %s96
      %p100 = scmp.eq.s32.totalorder %s18, 0
      %p101 = por %p99, %p100
      %p102 = scmp.ne.s32.totalorder %s94, %s96
      %p103 = scmp.eq.s32.totalorder %s23, 1
      %p104 = por %p102, %p103
      %p105 = scmp.ne.s32.totalorder %s96, %s97
      %p106 = scmp.eq.s32.totalorder %s23, 0
      %p107 = por %p105, %p106
      %p108 = scmp.ne.s32.totalorder %s96, %s97
      %p109 = scmp.eq.s32.totalorder %s24, 1
      %p110 = por %p108, %p109
      %p112 = scmp.ne.s32.totalorder %s97, %s111
      %p113 = scmp.eq.s32.totalorder %s24, 0
      %p114 = por %p112, %p113
      %s116 = sadd.s32 %s115, 1
      %p119 = scmp.eq.s32.totalorder %s18, 1
      %p120 = scmp.ne.s32.totalorder %s115, %s117
      %p121 = scmp.eq.s32.totalorder %s18, 0
      %p122 = por %p120, %p121
      %p123 = scmp.ne.s32.totalorder %s115, %s117
      %p124 = scmp.eq.s32.totalorder %s23, 1
      %p125 = por %p123, %p124
      %p126 = scmp.ne.s32.totalorder %s117, %s118
      %p127 = scmp.eq.s32.totalorder %s23, 0
      %p128 = por %p126, %p127
      %p129 = scmp.ne.s32.totalorder %s117, %s118
      %p130 = scmp.eq.s32.totalorder %s24, 1
      %p131 = por %p129, %p130
      %p133 = scmp.ne.s32.totalorder %s118, %s132
      %p134 = scmp.eq.s32.totalorder %s24, 0
      %p135 = por %p133, %p134
      %s136 = ssub.s32 %s18, %s25
      %p137 = scmp.eq.s32.totalorder %s136, 0
      %s139 = sadd.s32 %s138, 1
      %s140 = scalar_select %p137, %s138, %s139
      %p143 = pneg %p137
      %p144 = scmp.eq.s32.totalorder %s18, 1
      %p145 = por %p143, %p144
      %p146 = scmp.ne.s32.totalorder %s138, %s141
      %p147 = scmp.eq.s32.totalorder %s18, 0
      %p148 = por %p146, %p147
      %p149 = scmp.ne.s32.totalorder %s138, %s141
      %p150 = scmp.eq.s32.totalorder %s23, 1
      %p151 = por %p149, %p150
      %p152 = scmp.ne.s32.totalorder %s141, %s142
      %p153 = scmp.eq.s32.totalorder %s23, 0
      %p154 = por %p152, %p153
      %p155 = scmp.ne.s32.totalorder %s141, %s142
      %p156 = scmp.eq.s32.totalorder %s24, 1
      %p157 = por %p155, %p156
      %p159 = scmp.ne.s32.totalorder %s142, %s158
      %p160 = scmp.eq.s32.totalorder %s24, 0
      %p161 = por %p159, %p160
      %p162 = scmp.le.s32.totalorder 1, %s18
      %p163 = scmp.lt.s32.totalorder %s18, 3
      %p164 = pnand %p162, %p163
      %p165 = pneg %p164
      // Predicated region
      $region9: #{tpu_custom_call.1} parent=5 // pred_check
        _
      $region10: #{tpu_custom_call.1} parent=5 // pred_check_branch
        %167 = sbr.rel (%p164) target = $region12
      $region11: #{tpu_custom_call.1} parent=5 // pred_region
        %s168 = ssub.s32 %s18, 1
        // Predicated region
        $region13: #{tpu_custom_call.1} parent=11 // pred_check
          %p169 = pneg %p65
        $region14: #{tpu_custom_call.1} parent=11 // pred_check_branch
          %171 = sbr.rel (%p169) target = $region16
        $region15: #{tpu_custom_call.1} parent=11 // pred_region
          %s173 = ssub.s32 8192, 8192
          %174 = vsyncadd [#allocation6], %s173
          %s175 = sshll.u32 [#allocation5], 4
          %s176 = int_to_ptr.vmem [resolvable:$true] %s175
          %181 = dma.hbm_to_vmem [thread:$0]  %s1, 8192, %s176, [#allocation6], 512, 512, 32
        $region16: #{tpu_custom_call.1} parent=11 // pred_fallthru
          _
        // Predicated region
        $region17: #{tpu_custom_call.1} parent=11 // pred_check
          %p182 = pneg %p86
        $region18: #{tpu_custom_call.1} parent=11 // pred_check_branch
          %184 = sbr.rel (%p182) target = $region20
        $region19: #{tpu_custom_call.1} parent=11 // pred_region
          _
        $region20: #{tpu_custom_call.1} parent=11 // pred_fallthru
          _
        // Predicated region
        $region21: #{tpu_custom_call.1} parent=11 // pred_check
          %p185 = pneg %p107
        $region22: #{tpu_custom_call.1} parent=11 // pred_check_branch
          %187 = sbr.rel (%p185) target = $region24
        $region23: #{tpu_custom_call.1} parent=11 // pred_region
          %s189 = ssub.s32 8192, 8192
          %190 = vsyncadd [#allocation6], %s189
          %s191 = sshll.u32 [#allocation7], 4
          %s192 = int_to_ptr.vmem [resolvable:$true] %s191
          %197 = dma.hbm_to_vmem [thread:$0]  %s3, 8192, %s192, [#allocation6], 128, 128, 8
        $region24: #{tpu_custom_call.1} parent=11 // pred_fallthru
          _
        // Predicated region
        $region25: #{tpu_custom_call.1} parent=11 // pred_check
          %p198 = pneg %p128
        $region26: #{tpu_custom_call.1} parent=11 // pred_check_branch
          %200 = sbr.rel (%p198) target = $region28
        $region27: #{tpu_custom_call.1} parent=11 // pred_region
          _
        $region28: #{tpu_custom_call.1} parent=11 // pred_fallthru
          _
      $region12: #{tpu_custom_call.1} parent=5 // pred_fallthru
        _
      %p201 = scmp.lt.s32.totalorder %s18, 2
      // Predicated region
      $region29: #{tpu_custom_call.1} parent=5 // pred_check
        %p202 = pneg %p201
      $region30: #{tpu_custom_call.1} parent=5 // pred_check_branch
        %204 = sbr.rel (%p202) target = $region32
      $region31: #{tpu_custom_call.1} parent=5 // pred_region
        // Predicated region
        $region33: #{tpu_custom_call.1} parent=31 // pred_check
          %p205 = pneg %p38
        $region34: #{tpu_custom_call.1} parent=31 // pred_check_branch
          %207 = sbr.rel (%p205) target = $region36
        $region35: #{tpu_custom_call.1} parent=31 // pred_region
          %s208 = sand.u32 %s28, 1
          %s209 = scalar_lea.sflag [#allocation3], %s208
          %s210 = sand.u32 %s28, 1
          %s211 = smul.addr %s210, 8
          %s212 = scalar_lea.vmem [#allocation2], %s211
          %s214 = ssub.s32 128, 128
          %215 = vsyncadd %s209, %s214
          %s216 = smul.addr %s18, 128
          %s217 = scalar_lea.hbm %s0, %s216
          %s219 = sshll.u32 %s212, 4
          %s220 = int_to_ptr.vmem [resolvable:$true] %s219
          %222 = dma.hbm_to_vmem [thread:$0]  %s217, 128, %s220, %s209
        $region36: #{tpu_custom_call.1} parent=31 // pred_fallthru
          _
      $region32: #{tpu_custom_call.1} parent=5 // pred_fallthru
        _
      %p223 = scmp.le.s32.totalorder 1, %s18
      %p224 = scmp.lt.s32.totalorder %s18, 3
      %p225 = pnand %p223, %p224
      %p226 = pneg %p225
      // Predicated region
      $region37: #{tpu_custom_call.1} parent=5 // pred_check
        _
      $region38: #{tpu_custom_call.1} parent=5 // pred_check_branch
        %228 = sbr.rel (%p225) target = $region40
      $region39: #{tpu_custom_call.1} parent=5 // pred_region
        %s229 = ssub.s32 %s18, 1
        %s230 = sand.u32 %s31, 1
        %s231 = scalar_lea.sflag [#allocation3], %s230
        %s232 = sand.u32 %s31, 1
        %s233 = smul.addr %s232, 8
        %s234 = scalar_lea.vmem [#allocation2], %s233
        // Predicated region
        $region41: #{tpu_custom_call.1} parent=39 // pred_check
          %p235 = pneg %p44
        $region42: #{tpu_custom_call.1} parent=39 // pred_check_branch
          %237 = sbr.rel (%p235) target = $region44
        $region43: #{tpu_custom_call.1} parent=39 // pred_region
          %238 = dma.done %s231, 128
        $region44: #{tpu_custom_call.1} parent=39 // pred_fallthru
          _
        // Predicated region
        $region45: #{tpu_custom_call.1} parent=39 // pred_check
          %p239 = pneg %p65
        $region46: #{tpu_custom_call.1} parent=39 // pred_check_branch
          %241 = sbr.rel (%p239) target = $region48
        $region47: #{tpu_custom_call.1} parent=39 // pred_region
          %242 = dma.done [#allocation6], 8192
        $region48: #{tpu_custom_call.1} parent=39 // pred_fallthru
          _
        // Predicated region
        $region49: #{tpu_custom_call.1} parent=39 // pred_check
          %p243 = pneg %p107
        $region50: #{tpu_custom_call.1} parent=39 // pred_check_branch
          %245 = sbr.rel (%p243) target = $region52
        $region51: #{tpu_custom_call.1} parent=39 // pred_region
          %246 = dma.done [#allocation6], 8192
        $region52: #{tpu_custom_call.1} parent=39 // pred_fallthru
          _
        %s247 = sand.u32 %s31, 1
        %s248 = scalar_lea.sflag [#allocation3], %s247
        %s249 = sand.u32 %s31, 1
        %s250 = smul.addr %s249, 8
        %s251 = scalar_lea.vmem [#allocation2], %s250
        %p252 = pneg %p44
        %p253 = pneg %p41
        %p254 = pneg %p65
        %p255 = pneg %p62
        %p256 = pneg %p86
        %p257 = pneg %p83
        %p258 = pneg %p107
        %p259 = pneg %p104
        %p260 = pneg %p128
        %p261 = pneg %p125
        %p262 = pneg %p154
        %p263 = pneg %p151
        %s264 = sand.u32 %s141, 1
        %s265 = scalar_lea.sflag [#allocation4], %s264
        %s266 = sand.u32 %s141, 1
        %s267 = smul.addr %s266, 8
        %s268 = scalar_lea.vmem [#allocation8], %s267
        %v269 = vld [vmem:[%s234] sm:$0xff]
        %v270 = vld [vmem:[%s4] sm:$0x1]
        %v271 = vld [vmem:[#allocation5] sm:$0xff]
        %v272 = vld [vmem:[#allocation5 + $0x8] sm:$0xff]
        %v273 = vld [vmem:[#allocation5 + $0x10] sm:$0xff]
        %v274 = vld [vmem:[#allocation5 + $0x18] sm:$0xff]
        %v275 = vld [vmem:[#allocation5 + $0x20] sm:$0xff]
        %v276 = vld [vmem:[#allocation5 + $0x28] sm:$0xff]
        %v277 = vld [vmem:[#allocation5 + $0x30] sm:$0xff]
        %v278 = vld [vmem:[#allocation5 + $0x38] sm:$0xff]
        %v279 = vld [vmem:[#allocation5 + $0x40] sm:$0xff]
        %v280 = vld [vmem:[#allocation5 + $0x48] sm:$0xff]
        %v281 = vld [vmem:[#allocation5 + $0x50] sm:$0xff]
        %v282 = vld [vmem:[#allocation5 + $0x58] sm:$0xff]
        %v283 = vld [vmem:[#allocation5 + $0x60] sm:$0xff]
        %v284 = vld [vmem:[#allocation5 + $0x68] sm:$0xff]
        %v285 = vld [vmem:[#allocation5 + $0x70] sm:$0xff]
        %v286 = vld [vmem:[#allocation5 + $0x78] sm:$0xff]
        %v287 = vld [vmem:[#allocation5 + $0x80] sm:$0xff]
        %v288 = vld [vmem:[#allocation5 + $0x88] sm:$0xff]
        %v289 = vld [vmem:[#allocation5 + $0x90] sm:$0xff]
        %v290 = vld [vmem:[#allocation5 + $0x98] sm:$0xff]
        %v291 = vld [vmem:[#allocation5 + $0xa0] sm:$0xff]
        %v292 = vld [vmem:[#allocation5 + $0xa8] sm:$0xff]
        %v293 = vld [vmem:[#allocation5 + $0xb0] sm:$0xff]
        %v294 = vld [vmem:[#allocation5 + $0xb8] sm:$0xff]
        %v295 = vld [vmem:[#allocation5 + $0xc0] sm:$0xff]
        %v296 = vld [vmem:[#allocation5 + $0xc8] sm:$0xff]
        %v297 = vld [vmem:[#allocation5 + $0xd0] sm:$0xff]
        %v298 = vld [vmem:[#allocation5 + $0xd8] sm:$0xff]
        %v299 = vld [vmem:[#allocation5 + $0xe0] sm:$0xff]
        %v300 = vld [vmem:[#allocation5 + $0xe8] sm:$0xff]
        %v301 = vld [vmem:[#allocation5 + $0xf0] sm:$0xff]
        %v302 = vld [vmem:[#allocation5 + $0xf8] sm:$0xff]
        %v303 = vld [vmem:[#allocation5 + $0x100] sm:$0xff]
        %v304 = vld [vmem:[#allocation5 + $0x108] sm:$0xff]
        %v305 = vld [vmem:[#allocation5 + $0x110] sm:$0xff]
        %v306 = vld [vmem:[#allocation5 + $0x118] sm:$0xff]
        %v307 = vld [vmem:[#allocation5 + $0x120] sm:$0xff]
        %v308 = vld [vmem:[#allocation5 + $0x128] sm:$0xff]
        %v309 = vld [vmem:[#allocation5 + $0x130] sm:$0xff]
        %v310 = vld [vmem:[#allocation5 + $0x138] sm:$0xff]
        %v311 = vld [vmem:[#allocation5 + $0x140] sm:$0xff]
        %v312 = vld [vmem:[#allocation5 + $0x148] sm:$0xff]
        %v313 = vld [vmem:[#allocation5 + $0x150] sm:$0xff]
        %v314 = vld [vmem:[#allocation5 + $0x158] sm:$0xff]
        %v315 = vld [vmem:[#allocation5 + $0x160] sm:$0xff]
        %v316 = vld [vmem:[#allocation5 + $0x168] sm:$0xff]
        %v317 = vld [vmem:[#allocation5 + $0x170] sm:$0xff]
        %v318 = vld [vmem:[#allocation5 + $0x178] sm:$0xff]
        %v319 = vld [vmem:[#allocation5 + $0x180] sm:$0xff]
        %v320 = vld [vmem:[#allocation5 + $0x188] sm:$0xff]
        %v321 = vld [vmem:[#allocation5 + $0x190] sm:$0xff]
        %v322 = vld [vmem:[#allocation5 + $0x198] sm:$0xff]
        %v323 = vld [vmem:[#allocation5 + $0x1a0] sm:$0xff]
        %v324 = vld [vmem:[#allocation5 + $0x1a8] sm:$0xff]
        %v325 = vld [vmem:[#allocation5 + $0x1b0] sm:$0xff]
        %v326 = vld [vmem:[#allocation5 + $0x1b8] sm:$0xff]
        %v327 = vld [vmem:[#allocation5 + $0x1c0] sm:$0xff]
        %v328 = vld [vmem:[#allocation5 + $0x1c8] sm:$0xff]
        %v329 = vld [vmem:[#allocation5 + $0x1d0] sm:$0xff]
        %v330 = vld [vmem:[#allocation5 + $0x1d8] sm:$0xff]
        %v331 = vld [vmem:[#allocation5 + $0x1e0] sm:$0xff]
        %v332 = vld [vmem:[#allocation5 + $0x1e8] sm:$0xff]
        %v333 = vld [vmem:[#allocation5 + $0x1f0] sm:$0xff]
        %v334 = vld [vmem:[#allocation5 + $0x1f8] sm:$0xff]
        %v335 = vld [vmem:[%s2] sm:$0xf]
        %v337 = vlaneseq
        %v338 = vshrl.u32 %v337, 7
        %v339 = vsub.s32 0, %v338
        %v340 = vrot.slane %v335, %v339
        %v341 = vlaneseq
        %v342 = vshrl.u32 %v341, 7
        %v343 = vsub.s32 1, %v342
        %v344 = vrot.slane %v335, %v343
        %v345 = vlaneseq
        %v346 = vshrl.u32 %v345, 7
        %v347 = vsub.s32 2, %v346
        %v348 = vrot.slane %v335, %v347
        %v349 = vlaneseq
        %v350 = vshrl.u32 %v349, 7
        %v351 = vsub.s32 3, %v350
        %v352 = vrot.slane %v335, %v351
        %357 = vmatprep.subr.mxu0 %v272
        %358 = vmatpush1.msra.mxu0 %v271
        %359 = vmatprep.subr.mxu0 %v276
        %360 = vmatpush1.msra.mxu0 %v275
        %361 = vmatprep.subr.mxu0 %v280
        %362 = vmatpush1.msra.mxu0 %v279
        %363 = vmatprep.subr.mxu0 %v284
        %364 = vmatpush1.msra.mxu0 %v283
        %365 = vmatprep.subr.mxu0 %v288
        %366 = vmatpush1.msra.mxu0 %v287
        %367 = vmatprep.subr.mxu0 %v292
        %368 = vmatpush1.msra.mxu0 %v291
        %369 = vmatprep.subr.mxu0 %v296
        %370 = vmatpush1.msra.mxu0 %v295
        %371 = vmatprep.subr.mxu0 %v300
        %372 = vmatpush1.msra.mxu0 %v299
        %373 = vmatprep.subr.mxu0 %v304
        %374 = vmatpush1.msra.mxu0 %v303
        %375 = vmatprep.subr.mxu0 %v308
        %376 = vmatpush1.msra.mxu0 %v307
        %377 = vmatprep.subr.mxu0 %v312
        %378 = vmatpush1.msra.mxu0 %v311
        %379 = vmatprep.subr.mxu0 %v316
        %380 = vmatpush1.msra.mxu0 %v315
        %381 = vmatprep.subr.mxu0 %v320
        %382 = vmatpush1.msra.mxu0 %v319
        %383 = vmatprep.subr.mxu0 %v324
        %384 = vmatpush1.msra.mxu0 %v323
        %385 = vmatprep.subr.mxu0 %v328
        %386 = vmatpush1.msra.mxu0 %v327
        %387 = vmatprep.subr.mxu0 %v332
        %388 = vmatpush1.msra.mxu0 %v331
        %389 = vmatprep.subr.mxu0 0.0
        %390 = vmatpush1.msra.mxu0 0.0
        %391 = vmatprep.subr.mxu0 0.0
        %392 = vmatpush1.msra.mxu0 0.0
        %393 = vmatprep.subr.mxu0 0.0
        %394 = vmatpush1.msra.mxu0 0.0
        %395 = vmatprep.subr.mxu0 0.0
        %396 = vmatpush1.msra.mxu0 0.0
        %397 = vmatprep.subr.mxu0 0.0
        %398 = vmatpush1.msra.mxu0 0.0
        %399 = vmatprep.subr.mxu0 0.0
        %400 = vmatpush1.msra.mxu0 0.0
        %401 = vmatprep.subr.mxu0 0.0
        %402 = vmatpush1.msra.mxu0 0.0
        %403 = vmatprep.subr.mxu0 0.0
        %404 = vmatpush1.msra.mxu0 0.0
        %405 = vmatprep.subr.mxu0 0.0
        %406 = vmatpush1.msra.mxu0 0.0
        %407 = vmatprep.subr.mxu0 0.0
        %408 = vmatpush1.msra.mxu0 0.0
        %409 = vmatprep.subr.mxu0 0.0
        %410 = vmatpush1.msra.mxu0 0.0
        %411 = vmatprep.subr.mxu0 0.0
        %412 = vmatpush1.msra.mxu0 0.0
        %413 = vmatprep.subr.mxu0 0.0
        %414 = vmatpush1.msra.mxu0 0.0
        %415 = vmatprep.subr.mxu0 0.0
        %416 = vmatpush1.msra.mxu0 0.0
        %417 = vmatprep.subr.mxu0 0.0
        %418 = vmatpush1.msra.mxu0 0.0
        %419 = vmatprep.subr.mxu0 0.0
        %420 = vmatpush1.msra.mxu0 0.0
        %421 = vmatprep.mubr.f32.mxu0 0.0
        %422 = vmatmul.mubr.f32.gmra.mrb[0].mxu0 %v269
        %v423 = vpop.f32.mrb[0].mxu0
        %v424 = vadd.f32 %v340, %v423
        %v425 = vpop.f32.mrb[0].mxu0
        %v426 = vadd.f32 %v344, %v425
        %427 = vdwg.mxu0
        %428 = vmatprep.subr.mxu0 %v274
        %429 = vmatpush1.msra.mxu0 %v273
        %430 = vmatprep.subr.mxu0 %v278
        %431 = vmatpush1.msra.mxu0 %v277
        %432 = vmatprep.subr.mxu0 %v282
        %433 = vmatpush1.msra.mxu0 %v281
        %434 = vmatprep.subr.mxu0 %v286
        %435 = vmatpush1.msra.mxu0 %v285
        %436 = vmatprep.subr.mxu0 %v290
        %437 = vmatpush1.msra.mxu0 %v289
        %438 = vmatprep.subr.mxu0 %v294
        %439 = vmatpush1.msra.mxu0 %v293
        %440 = vmatprep.subr.mxu0 %v298
        %441 = vmatpush1.msra.mxu0 %v297
        %442 = vmatprep.subr.mxu0 %v302
        %443 = vmatpush1.msra.mxu0 %v301
        %444 = vmatprep.subr.mxu0 %v306
        %445 = vmatpush1.msra.mxu0 %v305
        %446 = vmatprep.subr.mxu0 %v310
        %447 = vmatpush1.msra.mxu0 %v309
        %448 = vmatprep.subr.mxu0 %v314
        %449 = vmatpush1.msra.mxu0 %v313
        %450 = vmatprep.subr.mxu0 %v318
        %451 = vmatpush1.msra.mxu0 %v317
        %452 = vmatprep.subr.mxu0 %v322
        %453 = vmatpush1.msra.mxu0 %v321
        %454 = vmatprep.subr.mxu0 %v326
        %455 = vmatpush1.msra.mxu0 %v325
        %456 = vmatprep.subr.mxu0 %v330
        %457 = vmatpush1.msra.mxu0 %v329
        %458 = vmatprep.subr.mxu0 %v334
        %459 = vmatpush1.msra.mxu0 %v333
        %460 = vmatprep.subr.mxu0 0.0
        %461 = vmatpush1.msra.mxu0 0.0
        %462 = vmatprep.subr.mxu0 0.0
        %463 = vmatpush1.msra.mxu0 0.0
        %464 = vmatprep.subr.mxu0 0.0
        %465 = vmatpush1.msra.mxu0 0.0
        %466 = vmatprep.subr.mxu0 0.0
        %467 = vmatpush1.msra.mxu0 0.0
        %468 = vmatprep.subr.mxu0 0.0
        %469 = vmatpush1.msra.mxu0 0.0
        %470 = vmatprep.subr.mxu0 0.0
        %471 = vmatpush1.msra.mxu0 0.0
        %472 = vmatprep.subr.mxu0 0.0
        %473 = vmatpush1.msra.mxu0 0.0
        %474 = vmatprep.subr.mxu0 0.0
        %475 = vmatpush1.msra.mxu0 0.0
        %476 = vmatprep.subr.mxu0 0.0
        %477 = vmatpush1.msra.mxu0 0.0
        %478 = vmatprep.subr.mxu0 0.0
        %479 = vmatpush1.msra.mxu0 0.0
        %480 = vmatprep.subr.mxu0 0.0
        %481 = vmatpush1.msra.mxu0 0.0
        %482 = vmatprep.subr.mxu0 0.0
        %483 = vmatpush1.msra.mxu0 0.0
        %484 = vmatprep.subr.mxu0 0.0
        %485 = vmatpush1.msra.mxu0 0.0
        %486 = vmatprep.subr.mxu0 0.0
        %487 = vmatpush1.msra.mxu0 0.0
        %488 = vmatprep.subr.mxu0 0.0
        %489 = vmatpush1.msra.mxu0 0.0
        %490 = vmatprep.subr.mxu0 0.0
        %491 = vmatpush1.msra.mxu0 0.0
        %492 = vmatprep.mubr.f32.mxu0 0.0
        %493 = vmatmul.mubr.f32.gmra.mrb[0].mxu0 %v269
        %v494 = vpop.f32.mrb[0].mxu0
        %v495 = vadd.f32 %v348, %v494
        %v496 = vpop.f32.mrb[0].mxu0
        %v497 = vadd.f32 %v352, %v496
        %498 = vdwg.mxu0
        %v499 = vmul.f32 %v424, 0.7978846
        %v500 = vmul.f32 %v426, 0.7978846
        %v501 = vmul.f32 %v495, 0.7978846
        %v502 = vmul.f32 %v497, 0.7978846
        %v503 = vmul.f32 %v424, 0.044715
        %v504 = vmul.f32 %v426, 0.044715
        %v505 = vmul.f32 %v495, 0.044715
        %v506 = vmul.f32 %v497, 0.044715
        %v507 = vmul.f32 %v503, %v424
        %v508 = vmul.f32 %v504, %v426
        %v509 = vmul.f32 %v505, %v495
        %v510 = vmul.f32 %v506, %v497
        %v511 = vadd.f32 %v507, 1.0
        %v512 = vadd.f32 %v508, 1.0
        %v513 = vadd.f32 %v509, 1.0
        %v514 = vadd.f32 %v510, 1.0
        %v515 = vmul.f32 %v499, %v511
        %v516 = vmul.f32 %v500, %v512
        %v517 = vmul.f32 %v501, %v513
        %v518 = vmul.f32 %v502, %v514
        %v519 = vmul.f32 %v424, 0.5
        %v520 = vmul.f32 %v426, 0.5
        %v521 = vmul.f32 %v495, 0.5
        %v522 = vmul.f32 %v497, 0.5
        %v523 = vtanh.pop %v515
        %v524 = vtanh.pop %v516
        %v525 = vtanh.pop %v517
        %v526 = vtanh.pop %v518
        %v527 = vadd.f32 %v523, 1.0
        %v528 = vadd.f32 %v524, 1.0
        %v529 = vadd.f32 %v525, 1.0
        %v530 = vadd.f32 %v526, 1.0
        %v531 = vmul.f32 %v519, %v527
        %v532 = vmul.f32 %v520, %v528
        %v533 = vmul.f32 %v521, %v529
        %v534 = vmul.f32 %v522, %v530
        %v535 = vld [vmem:[#allocation7] sm:$0xff]
        %v536 = vld [vmem:[#allocation7 + $0x8] sm:$0xff]
        %v537 = vld [vmem:[#allocation7 + $0x10] sm:$0xff]
        %v538 = vld [vmem:[#allocation7 + $0x18] sm:$0xff]
        %v539 = vld [vmem:[#allocation7 + $0x20] sm:$0xff]
        %v540 = vld [vmem:[#allocation7 + $0x28] sm:$0xff]
        %v541 = vld [vmem:[#allocation7 + $0x30] sm:$0xff]
        %v542 = vld [vmem:[#allocation7 + $0x38] sm:$0xff]
        %v543 = vld [vmem:[#allocation7 + $0x40] sm:$0xff]
        %v544 = vld [vmem:[#allocation7 + $0x48] sm:$0xff]
        %v545 = vld [vmem:[#allocation7 + $0x50] sm:$0xff]
        %v546 = vld [vmem:[#allocation7 + $0x58] sm:$0xff]
        %v547 = vld [vmem:[#allocation7 + $0x60] sm:$0xff]
        %v548 = vld [vmem:[#allocation7 + $0x68] sm:$0xff]
        %v549 = vld [vmem:[#allocation7 + $0x70] sm:$0xff]
        %v550 = vld [vmem:[#allocation7 + $0x78] sm:$0xff]
        %v551 = vld [vmem:[#allocation7 + $0x80] sm:$0xff]
        %v552 = vld [vmem:[#allocation7 + $0x88] sm:$0xff]
        %v553 = vld [vmem:[#allocation7 + $0x90] sm:$0xff]
        %v554 = vld [vmem:[#allocation7 + $0x98] sm:$0xff]
        %v555 = vld [vmem:[#allocation7 + $0xa0] sm:$0xff]
        %v556 = vld [vmem:[#allocation7 + $0xa8] sm:$0xff]
        %v557 = vld [vmem:[#allocation7 + $0xb0] sm:$0xff]
        %v558 = vld [vmem:[#allocation7 + $0xb8] sm:$0xff]
        %v559 = vld [vmem:[#allocation7 + $0xc0] sm:$0xff]
        %v560 = vld [vmem:[#allocation7 + $0xc8] sm:$0xff]
        %v561 = vld [vmem:[#allocation7 + $0xd0] sm:$0xff]
        %v562 = vld [vmem:[#allocation7 + $0xd8] sm:$0xff]
        %v563 = vld [vmem:[#allocation7 + $0xe0] sm:$0xff]
        %v564 = vld [vmem:[#allocation7 + $0xe8] sm:$0xff]
        %v565 = vld [vmem:[#allocation7 + $0xf0] sm:$0xff]
        %v566 = vld [vmem:[#allocation7 + $0xf8] sm:$0xff]
        %v567 = vld [vmem:[#allocation7 + $0x100] sm:$0xff]
        %v568 = vld [vmem:[#allocation7 + $0x108] sm:$0xff]
        %v569 = vld [vmem:[#allocation7 + $0x110] sm:$0xff]
        %v570 = vld [vmem:[#allocation7 + $0x118] sm:$0xff]
        %v571 = vld [vmem:[#allocation7 + $0x120] sm:$0xff]
        %v572 = vld [vmem:[#allocation7 + $0x128] sm:$0xff]
        %v573 = vld [vmem:[#allocation7 + $0x130] sm:$0xff]
        %v574 = vld [vmem:[#allocation7 + $0x138] sm:$0xff]
        %v575 = vld [vmem:[#allocation7 + $0x140] sm:$0xff]
        %v576 = vld [vmem:[#allocation7 + $0x148] sm:$0xff]
        %v577 = vld [vmem:[#allocation7 + $0x150] sm:$0xff]
        %v578 = vld [vmem:[#allocation7 + $0x158] sm:$0xff]
        %v579 = vld [vmem:[#allocation7 + $0x160] sm:$0xff]
        %v580 = vld [vmem:[#allocation7 + $0x168] sm:$0xff]
        %v581 = vld [vmem:[#allocation7 + $0x170] sm:$0xff]
        %v582 = vld [vmem:[#allocation7 + $0x178] sm:$0xff]
        %v583 = vld [vmem:[#allocation7 + $0x180] sm:$0xff]
        %v584 = vld [vmem:[#allocation7 + $0x188] sm:$0xff]
        %v585 = vld [vmem:[#allocation7 + $0x190] sm:$0xff]
        %v586 = vld [vmem:[#allocation7 + $0x198] sm:$0xff]
        %v587 = vld [vmem:[#allocation7 + $0x1a0] sm:$0xff]
        %v588 = vld [vmem:[#allocation7 + $0x1a8] sm:$0xff]
        %v589 = vld [vmem:[#allocation7 + $0x1b0] sm:$0xff]
        %v590 = vld [vmem:[#allocation7 + $0x1b8] sm:$0xff]
        %v591 = vld [vmem:[#allocation7 + $0x1c0] sm:$0xff]
        %v592 = vld [vmem:[#allocation7 + $0x1c8] sm:$0xff]
        %v593 = vld [vmem:[#allocation7 + $0x1d0] sm:$0xff]
        %v594 = vld [vmem:[#allocation7 + $0x1d8] sm:$0xff]
        %v595 = vld [vmem:[#allocation7 + $0x1e0] sm:$0xff]
        %v596 = vld [vmem:[#allocation7 + $0x1e8] sm:$0xff]
        %v597 = vld [vmem:[#allocation7 + $0x1f0] sm:$0xff]
        %v598 = vld [vmem:[#allocation7 + $0x1f8] sm:$0xff]
        %599 = vmatprep.subr.mxu0 0.0
        %600 = vmatpush1.msra.mxu0 %v535
        %601 = vmatprep.subr.mxu0 0.0
        %602 = vmatpush1.msra.mxu0 %v536
        %603 = vmatprep.subr.mxu0 0.0
        %604 = vmatpush1.msra.mxu0 %v537
        %605 = vmatprep.subr.mxu0 0.0
        %606 = vmatpush1.msra.mxu0 %v538
        %607 = vmatprep.subr.mxu0 0.0
        %608 = vmatpush1.msra.mxu0 %v539
        %609 = vmatprep.subr.mxu0 0.0
        %610 = vmatpush1.msra.mxu0 %v540
        %611 = vmatprep.subr.mxu0 0.0
        %612 = vmatpush1.msra.mxu0 %v541
        %613 = vmatprep.subr.mxu0 0.0
        %614 = vmatpush1.msra.mxu0 %v542
        %615 = vmatprep.subr.mxu0 0.0
        %616 = vmatpush1.msra.mxu0 %v543
        %617 = vmatprep.subr.mxu0 0.0
        %618 = vmatpush1.msra.mxu0 %v544
        %619 = vmatprep.subr.mxu0 0.0
        %620 = vmatpush1.msra.mxu0 %v545
        %621 = vmatprep.subr.mxu0 0.0
        %622 = vmatpush1.msra.mxu0 %v546
        %623 = vmatprep.subr.mxu0 0.0
        %624 = vmatpush1.msra.mxu0 %v547
        %625 = vmatprep.subr.mxu0 0.0
        %626 = vmatpush1.msra.mxu0 %v548
        %627 = vmatprep.subr.mxu0 0.0
        %628 = vmatpush1.msra.mxu0 %v549
        %629 = vmatprep.subr.mxu0 0.0
        %630 = vmatpush1.msra.mxu0 %v550
        %631 = vmatprep.subr.mxu0 0.0
        %632 = vmatpush1.msra.mxu0 %v551
        %633 = vmatprep.subr.mxu0 0.0
        %634 = vmatpush1.msra.mxu0 %v552
        %635 = vmatprep.subr.mxu0 0.0
        %636 = vmatpush1.msra.mxu0 %v553
        %637 = vmatprep.subr.mxu0 0.0
        %638 = vmatpush1.msra.mxu0 %v554
        %639 = vmatprep.subr.mxu0 0.0
        %640 = vmatpush1.msra.mxu0 %v555
        %641 = vmatprep.subr.mxu0 0.0
        %642 = vmatpush1.msra.mxu0 %v556
        %643 = vmatprep.subr.mxu0 0.0
        %644 = vmatpush1.msra.mxu0 %v557
        %645 = vmatprep.subr.mxu0 0.0
        %646 = vmatpush1.msra.mxu0 %v558
        %647 = vmatprep.subr.mxu0 0.0
        %648 = vmatpush1.msra.mxu0 %v559
        %649 = vmatprep.subr.mxu0 0.0
        %650 = vmatpush1.msra.mxu0 %v560
        %651 = vmatprep.subr.mxu0 0.0
        %652 = vmatpush1.msra.mxu0 %v561
        %653 = vmatprep.subr.mxu0 0.0
        %654 = vmatpush1.msra.mxu0 %v562
        %655 = vmatprep.subr.mxu0 0.0
        %656 = vmatpush1.msra.mxu0 %v563
        %657 = vmatprep.subr.mxu0 0.0
        %658 = vmatpush1.msra.mxu0 %v564
        %659 = vmatprep.subr.mxu0 0.0
        %660 = vmatpush1.msra.mxu0 %v565
        %661 = vmatprep.subr.mxu0 0.0
        %662 = vmatpush1.msra.mxu0 %v566
        %663 = vmatprep.mubr.f32.mxu0 %v532
        %664 = vmatmul.mubr.f32.gmra.mrb[0].mxu0 %v531
        %v665 = vpop.f32.mrb[0].mxu0
        %v666 = vadd.f32 0.0, %v665
        %v667 = vpop.f32.mrb[0].mxu0
        %668 = vdwg.mxu0
        %669 = vmatprep.subr.mxu0 0.0
        %670 = vmatpush1.msra.mxu0 %v567
        %671 = vmatprep.subr.mxu0 0.0
        %672 = vmatpush1.msra.mxu0 %v568
        %673 = vmatprep.subr.mxu0 0.0
        %674 = vmatpush1.msra.mxu0 %v569
        %675 = vmatprep.subr.mxu0 0.0
        %676 = vmatpush1.msra.mxu0 %v570
        %677 = vmatprep.subr.mxu0 0.0
        %678 = vmatpush1.msra.mxu0 %v571
        %679 = vmatprep.subr.mxu0 0.0
        %680 = vmatpush1.msra.mxu0 %v572
        %681 = vmatprep.subr.mxu0 0.0
        %682 = vmatpush1.msra.mxu0 %v573
        %683 = vmatprep.subr.mxu0 0.0
        %684 = vmatpush1.msra.mxu0 %v574
        %685 = vmatprep.subr.mxu0 0.0
        %686 = vmatpush1.msra.mxu0 %v575
        %687 = vmatprep.subr.mxu0 0.0
        %688 = vmatpush1.msra.mxu0 %v576
        %689 = vmatprep.subr.mxu0 0.0
        %690 = vmatpush1.msra.mxu0 %v577
        %691 = vmatprep.subr.mxu0 0.0
        %692 = vmatpush1.msra.mxu0 %v578
        %693 = vmatprep.subr.mxu0 0.0
        %694 = vmatpush1.msra.mxu0 %v579
        %695 = vmatprep.subr.mxu0 0.0
        %696 = vmatpush1.msra.mxu0 %v580
        %697 = vmatprep.subr.mxu0 0.0
        %698 = vmatpush1.msra.mxu0 %v581
        %699 = vmatprep.subr.mxu0 0.0
        %700 = vmatpush1.msra.mxu0 %v582
        %701 = vmatprep.subr.mxu0 0.0
        %702 = vmatpush1.msra.mxu0 %v583
        %703 = vmatprep.subr.mxu0 0.0
        %704 = vmatpush1.msra.mxu0 %v584
        %705 = vmatprep.subr.mxu0 0.0
        %706 = vmatpush1.msra.mxu0 %v585
        %707 = vmatprep.subr.mxu0 0.0
        %708 = vmatpush1.msra.mxu0 %v586
        %709 = vmatprep.subr.mxu0 0.0
        %710 = vmatpush1.msra.mxu0 %v587
        %711 = vmatprep.subr.mxu0 0.0
        %712 = vmatpush1.msra.mxu0 %v588
        %713 = vmatprep.subr.mxu0 0.0
        %714 = vmatpush1.msra.mxu0 %v589
        %715 = vmatprep.subr.mxu0 0.0
        %716 = vmatpush1.msra.mxu0 %v590
        %717 = vmatprep.subr.mxu0 0.0
        %718 = vmatpush1.msra.mxu0 %v591
        %719 = vmatprep.subr.mxu0 0.0
        %720 = vmatpush1.msra.mxu0 %v592
        %721 = vmatprep.subr.mxu0 0.0
        %722 = vmatpush1.msra.mxu0 %v593
        %723 = vmatprep.subr.mxu0 0.0
        %724 = vmatpush1.msra.mxu0 %v594
        %725 = vmatprep.subr.mxu0 0.0
        %726 = vmatpush1.msra.mxu0 %v595
        %727 = vmatprep.subr.mxu0 0.0
        %728 = vmatpush1.msra.mxu0 %v596
        %729 = vmatprep.subr.mxu0 0.0
        %730 = vmatpush1.msra.mxu0 %v597
        %731 = vmatprep.subr.mxu0 0.0
        %732 = vmatpush1.msra.mxu0 %v598
        %733 = vmatprep.mubr.f32.mxu0 %v534
        %734 = vmatmul.mubr.f32.gmra.mrb[0].mxu0 %v533
        %v735 = vpop.f32.mrb[0].mxu0
        %v736 = vadd.f32 %v666, %v735
        %v737 = vpop.f32.mrb[0].mxu0
        %738 = vdwg.mxu0
        %v740 = vlaneseq
        %v741 = vshrl.u32 %v740, 7
        %v742 = vsub.s32 0, %v741
        %v743 = vrot.slane %v270, %v742
        %v745 = vadd.f32 %v743, %v736
        %746 = vst [vmem:[%s268] sm:$0xff] %v745
        %s747 = sand.u32 %s141, 1
        %s748 = scalar_lea.sflag [#allocation4], %s747
        %s749 = sand.u32 %s141, 1
        %s750 = smul.addr %s749, 8
        %s751 = scalar_lea.vmem [#allocation8], %s750
        // Predicated region
        $region53: #{tpu_custom_call.1} parent=39 // pred_check
          %p752 = pneg %p151
        $region54: #{tpu_custom_call.1} parent=39 // pred_check_branch
          %754 = sbr.rel (%p752) target = $region56
        $region55: #{tpu_custom_call.1} parent=39 // pred_region
          %s756 = ssub.s32 128, 128
          %757 = vsyncadd %s748, %s756
          %s758 = smul.addr %s23, 128
          %s759 = scalar_lea.hbm %s5, %s758
          %s761 = sshll.u32 %s751, 4
          %s762 = int_to_ptr.vmem [resolvable:$true] %s761
          %764 = dma.vmem_to_hbm [thread:$0]  %s762, 128, %s759, %s748
        $region56: #{tpu_custom_call.1} parent=39 // pred_fallthru
          _
      $region40: #{tpu_custom_call.1} parent=5 // pred_fallthru
        _
      %p765 = scmp.le.s32.totalorder 2, %s18
      // Predicated region
      $region57: #{tpu_custom_call.1} parent=5 // pred_check
        %p766 = pneg %p765
      $region58: #{tpu_custom_call.1} parent=5 // pred_check_branch
        %768 = sbr.rel (%p766) target = $region60
      $region59: #{tpu_custom_call.1} parent=5 // pred_region
        %s769 = ssub.s32 %s18, 2
        // Predicated region
        $region61: #{tpu_custom_call.1} parent=59 // pred_check
          %p770 = pneg %p157
        $region62: #{tpu_custom_call.1} parent=59 // pred_check_branch
          %772 = sbr.rel (%p770) target = $region64
        $region63: #{tpu_custom_call.1} parent=59 // pred_region
          %s773 = sand.u32 %s142, 1
          %s774 = scalar_lea.sflag [#allocation4], %s773
          %s775 = sand.u32 %s142, 1
          %s776 = smul.addr %s775, 8
          %s777 = scalar_lea.vmem [#allocation8], %s776
          %778 = dma.done %s774, 128
        $region64: #{tpu_custom_call.1} parent=59 // pred_fallthru
          _
      $region60: #{tpu_custom_call.1} parent=5 // pred_fallthru
        _
    $region6: #{tpu_custom_call.1} parent=1 // loop_footer
      %s22 = sadd.s32 1, %s18
    $region7: #{tpu_custom_call.1} parent=1 // loop_footer_branch
      %17 = sbr.rel target = $region3
    $region8: #{tpu_custom_call.1} parent=1 // loop_exit
      _
    %779 = vsyncpa [#allocation3], 1
    %s780 = scalar_lea.sflag [#allocation3], 1
    %781 = vsyncpa %s780, 1
    %782 = vsyncpa [#allocation6], 1
    %783 = vsyncpa [#allocation4], 1
    %s784 = scalar_lea.sflag [#allocation4], 1
    %785 = vsyncpa %s784, 1

</llo_original>
